<compile_context>
chip_gen: v7x
topology: tpu7x:2x2x1
jax: 0.10.0
libtpu: 0.0.40
codegen_flags: <defaults>
</compile_context>

<pallas_src>
import jax
import jax.numpy as jnp
from jax.experimental import pallas as pl
from jax.experimental.pallas import tpu as pltpu


def lstm_last_hidden_kernel(idx_ref, emb_ref, wih_ref, whh_ref, b_ref, out_ref):
    """Embedding gather + single-layer LSTM over the sequence; emits only the final hidden."""
    S = idx_ref.shape[0]
    V = emb_ref.shape[0]
    H = out_ref.shape[1]

    # ---- In-kernel embedding gather via one-hot matmul (MXU) -----------------------------
    # Exact row selection: the one-hot is exact in bf16 and the selected rows are the same
    # bf16-rounded values the projection matmul would see anyway.
    # TODO(synk): out-of-range ids yield a zero embedding here; PyTorch nn.Embedding raises.
    idxs = idx_ref[...]                                                  # (S, 1) int32
    vocab_iota = jax.lax.broadcasted_iota(jnp.int32, (S, V), 1)          # (S, V)
    onehot = (vocab_iota == idxs).astype(jnp.bfloat16)                   # (S, V)
    embs = jnp.dot(onehot, emb_ref[...].astype(jnp.bfloat16),
                   preferred_element_type=jnp.float32)                   # (S, E) f32

    # ---- Hoisted input projection: one batched MXU pass + one bias broadcast-add ---------
    pre_gates = (
        jnp.dot(embs.astype(jnp.bfloat16), wih_ref[...].astype(jnp.bfloat16),
                preferred_element_type=jnp.float32)
        + b_ref[...]
    )                                                                    # (S, 4H) f32

    # Recurrent weights resident in vregs (bf16) across the recurrence.
    whh_bf16 = whh_ref[...].astype(jnp.bfloat16)                         # (H, 4H)

    h = jnp.zeros((1, H), dtype=jnp.float32)
    c = jnp.zeros((1, H), dtype=jnp.float32)

    def step(gates_row, h, c):
        # Only this tiny (1,H)x(H,4H) bf16 matmul remains on the serial critical path.
        gates = gates_row + jnp.dot(h.astype(jnp.bfloat16), whh_bf16,
                                    preferred_element_type=jnp.float32)  # (1, 4H) f32
        # One sigmoid + one tanh over the whole 4H-wide vreg, then lane-slice per gate.
        sg = jax.nn.sigmoid(gates)
        tg = jnp.tanh(gates)
        i_g = sg[:, 0 * H:1 * H]
        f_g = sg[:, 1 * H:2 * H]
        g_g = tg[:, 2 * H:3 * H]
        o_g = sg[:, 3 * H:4 * H]
        c_new = f_g * c + i_g * g_g
        h_new = o_g * jnp.tanh(c_new)
        return h_new, c_new

    if S <= 32:
        # Fully unrolled recurrence (S static): LLO gets cross-iteration visibility,
        # all pre_gates row slices are static.
        for t in range(S):
            h, c = step(pre_gates[t:t + 1, :], h, c)
    else:
        # Guard against instruction-memory / compile-time blowup at large max_len.
        def body(t, carry):
            hh, cc = carry
            row = jax.lax.dynamic_slice_in_dim(pre_gates, t, 1, axis=0)
            return step(row, hh, cc)
        h, c = jax.lax.fori_loop(0, S, body, (h, c), unroll=4)

    out_ref[...] = h


def prepare_lstm_params(w_ih, w_hh, b_ih, b_hh):
    """One-time host prep of frozen inference weights (removes per-call transpose HLOs).

    w_ih: (4H, E)  w_hh: (4H, H)  b_ih/b_hh: (4H,)   (PyTorch nn.LSTM parameter shapes)
    Returns (wih_t (E,4H), whh_t (H,4H), bias (1,4H)) in float32.
    """
    H = w_hh.shape[1]
    wih_t = jnp.asarray(w_ih, jnp.float32).T
    whh_t = jnp.asarray(w_hh, jnp.float32).T
    bias = (jnp.asarray(b_ih, jnp.float32) + jnp.asarray(b_hh, jnp.float32)).reshape(1, 4 * H)
    return wih_t, whh_t, bias


def dialogue_acts_lstm_forward(dialogue_acts_idxs, emb_table, wih_t, whh_t, bias):
    """Per-call path: embedding gather + LSTM fused in a single gridless Pallas kernel.

    dialogue_acts_idxs: (t, max_len) int32 with t == 1 (implied by the PyTorch .view)
    emb_table:          (vocab, emb_dim) float32
    wih_t/whh_t/bias:   from prepare_lstm_params()
    Returns last_hidden with shape (1, 1, H), matching PyTorch nn.LSTM output.
    """
    t, max_len = dialogue_acts_idxs.shape
    emb_dim = emb_table.shape[1]
    H = whh_t.shape[0]
    assert t == 1, "PyTorch .view(max_len, 1, emb_dim) implies t == 1"

    idxs = dialogue_acts_idxs.reshape(max_len, 1).astype(jnp.int32)       # (S, 1)
    S, E = max_len, emb_dim

    vmem = pl.BlockSpec(memory_space=pltpu.MemorySpace.VMEM)
    last_h = pl.pallas_call(
        lstm_last_hidden_kernel,
        out_shape=jax.ShapeDtypeStruct((1, H), jnp.float32),
        in_specs=[vmem, vmem, vmem, vmem, vmem],
        out_specs=vmem,
    )(idxs, emb_table.astype(jnp.float32), wih_t, whh_t, bias)

    return last_h.reshape(1, 1, H)   # (num_layers=1, batch=1, hidden_dim)


def _reference_forward(dialogue_acts_idxs, emb_table, w_ih, w_hh, b_ih, b_hh):
    """Plain-JAX f32 reference mirroring PyTorch nn.LSTM (gate order [i,f,g,o])."""
    max_len = dialogue_acts_idxs.shape[1]
    emb_dim = emb_table.shape[1]
    H = w_hh.shape[1]
    embs = jnp.take(emb_table, dialogue_acts_idxs.reshape(-1), axis=0)
    embs = embs.reshape(max_len, emb_dim).astype(jnp.float32)
    bias = (b_ih + b_hh).astype(jnp.float32)

    h = jnp.zeros((H,), jnp.float32)
    c = jnp.zeros((H,), jnp.float32)
    for s in range(max_len):
        g = w_ih @ embs[s] + w_hh @ h + bias
        i_g = jax.nn.sigmoid(g[0 * H:1 * H])
        f_g = jax.nn.sigmoid(g[1 * H:2 * H])
        g_g = jnp.tanh(g[2 * H:3 * H])
        o_g = jax.nn.sigmoid(g[3 * H:4 * H])
        c = f_g * c + i_g * g_g
        h = o_g * jnp.tanh(c)
    return h.reshape(1, 1, H)


if __name__ == "__main__":
    # Small, deterministic configuration consistent with the module's forward.
    emb_dim = 32
    hidden_dim = 32
    vocab_size = 16
    max_len = 8          # sequence length of the single (t == 1) dialogue-act turn

    key = jax.random.PRNGKey(0)
    k_emb, k_wih, k_whh, k_bih, k_bhh, k_idx = jax.random.split(key, 6)

    emb_table = jax.random.normal(k_emb, (vocab_size, emb_dim), dtype=jnp.float32) * 0.1
    w_ih = jax.random.normal(k_wih, (4 * hidden_dim, emb_dim), dtype=jnp.float32) * 0.1
    w_hh = jax.random.normal(k_whh, (4 * hidden_dim, hidden_dim), dtype=jnp.float32) * 0.1
    b_ih = jax.random.normal(k_bih, (4 * hidden_dim,), dtype=jnp.float32) * 0.1
    b_hh = jax.random.normal(k_bhh, (4 * hidden_dim,), dtype=jnp.float32) * 0.1

    dialogue_acts_idxs = jax.random.randint(
        k_idx, (1, max_len), minval=0, maxval=vocab_size, dtype=jnp.int32
    )

    # One-time weight prep (frozen inference weights); per-call path has no transposes.
    wih_t, whh_t, bias = prepare_lstm_params(w_ih, w_hh, b_ih, b_hh)
    wih_t, whh_t, bias = jax.block_until_ready((wih_t, whh_t, bias))

    last_hidden = dialogue_acts_lstm_forward(
        dialogue_acts_idxs, emb_table, wih_t, whh_t, bias
    )
    jax.block_until_ready(last_hidden)
    assert last_hidden.shape == (1, 1, hidden_dim)

    ref = _reference_forward(
        dialogue_acts_idxs, emb_table, w_ih, w_hh, b_ih, b_hh
    )
    jax.block_until_ready(ref)
    # bf16 MXU operands (f32 accumulation) drift ~1e-4..1e-3 from the pure-f32 reference.
    assert jnp.allclose(last_hidden, ref, atol=3e-3, rtol=3e-3), "mismatch vs reference"

    print("KERNEL_OK")
</pallas_src>

<mosaic_0001>
module attributes {stable_mosaic.version = 11 : i64} {
  func.func @lstm_last_hidden_kernel(%arg0: memref<8x1xi32, #tpu.memory_space<vmem>>, %arg1: memref<16x32xf32, #tpu.memory_space<vmem>>, %arg2: memref<32x128xf32, #tpu.memory_space<vmem>>, %arg3: memref<32x128xf32, #tpu.memory_space<vmem>>, %arg4: memref<1x128xf32, #tpu.memory_space<vmem>>, %arg5: memref<1x32xf32, #tpu.memory_space<vmem>>) attributes {dimension_semantics = [], scalar_prefetch = 0 : i64, scratch_operands = 0 : i64, tpu.core_type = #tpu.core_type<tc>} {
    %c0 = arith.constant 0 : index
    %c0_0 = arith.constant 0 : index
    %0 = vector.load %arg0[%c0, %c0_0] : memref<8x1xi32, #tpu.memory_space<vmem>>, vector<8x1xi32>
    %1 = tpu.iota {dimensions = array<i32: 1>} : vector<8x16xi32>
    %2 = vector.broadcast %0 : vector<8x1xi32> to vector<8x16xi32>
    %3 = arith.cmpi eq, %1, %2 : vector<8x16xi32>
    %4 = arith.extui %3 : vector<8x16xi1> to vector<8x16xi32>
    %5 = arith.sitofp %4 : vector<8x16xi32> to vector<8x16xf32>
    %6 = arith.truncf %5 : vector<8x16xf32> to vector<8x16xbf16>
    %c0_1 = arith.constant 0 : index
    %c0_2 = arith.constant 0 : index
    %7 = vector.load %arg1[%c0_1, %c0_2] : memref<16x32xf32, #tpu.memory_space<vmem>>, vector<16x32xf32>
    %8 = arith.truncf %7 : vector<16x32xf32> to vector<16x32xbf16>
    %cst = arith.constant dense<0.000000e+00> : vector<8x32xf32>
    %9 = tpu.matmul %6, %8, %cst {dimension_numbers = #tpu.dot_dimension_numbers<[1], [0], [0], [1], [0, 0, 1, 1], [], []>} : vector<8x16xbf16>, vector<16x32xbf16>, vector<8x32xf32> -> vector<8x32xf32>
    %10 = arith.truncf %9 : vector<8x32xf32> to vector<8x32xbf16>
    %c0_3 = arith.constant 0 : index
    %c0_4 = arith.constant 0 : index
    %11 = vector.load %arg2[%c0_3, %c0_4] : memref<32x128xf32, #tpu.memory_space<vmem>>, vector<32x128xf32>
    %12 = arith.truncf %11 : vector<32x128xf32> to vector<32x128xbf16>
    %cst_5 = arith.constant dense<0.000000e+00> : vector<8x128xf32>
    %13 = tpu.matmul %10, %12, %cst_5 {dimension_numbers = #tpu.dot_dimension_numbers<[1], [0], [0], [1], [0, 0, 1, 1], [], []>} : vector<8x32xbf16>, vector<32x128xbf16>, vector<8x128xf32> -> vector<8x128xf32>
    %c0_6 = arith.constant 0 : index
    %c0_7 = arith.constant 0 : index
    %14 = vector.load %arg4[%c0_6, %c0_7] : memref<1x128xf32, #tpu.memory_space<vmem>>, vector<1x128xf32>
    %15 = vector.broadcast %14 : vector<1x128xf32> to vector<8x128xf32>
    %16 = arith.addf %13, %15 : vector<8x128xf32>
    %c0_8 = arith.constant 0 : index
    %c0_9 = arith.constant 0 : index
    %17 = vector.load %arg3[%c0_8, %c0_9] : memref<32x128xf32, #tpu.memory_space<vmem>>, vector<32x128xf32>
    %18 = arith.truncf %17 : vector<32x128xf32> to vector<32x128xbf16>
    %cst_10 = arith.constant 0.000000e+00 : f32
    %19 = vector.broadcast %cst_10 : f32 to vector<1x32xf32>
    %cst_11 = arith.constant 0.000000e+00 : f32
    %20 = vector.broadcast %cst_11 : f32 to vector<1x32xf32>
    %21 = vector.extract_strided_slice %16 {offsets = [0, 0], sizes = [1, 128], strides = [1, 1]} : vector<8x128xf32> to vector<1x128xf32>
    %22 = arith.truncf %19 : vector<1x32xf32> to vector<1x32xbf16>
    %cst_12 = arith.constant dense<0.000000e+00> : vector<1x128xf32>
    %23 = tpu.matmul %22, %18, %cst_12 {dimension_numbers = #tpu.dot_dimension_numbers<[1], [0], [0], [1], [0, 0, 1, 1], [], []>} : vector<1x32xbf16>, vector<32x128xbf16>, vector<1x128xf32> -> vector<1x128xf32>
    %24 = arith.addf %21, %23 : vector<1x128xf32>
    %25 = arith.negf %24 : vector<1x128xf32>
    %26 = math.exp %25 : vector<1x128xf32>
    %cst_13 = arith.constant 1.000000e+00 : f32
    %27 = vector.broadcast %cst_13 : f32 to vector<1x128xf32>
    %28 = arith.addf %27, %26 : vector<1x128xf32>
    %29 = arith.divf %27, %28 : vector<1x128xf32>
    %30 = math.tanh %24 : vector<1x128xf32>
    %31 = vector.extract_strided_slice %29 {offsets = [0, 0], sizes = [1, 32], strides = [1, 1]} : vector<1x128xf32> to vector<1x32xf32>
    %32 = vector.extract_strided_slice %29 {offsets = [0, 32], sizes = [1, 32], strides = [1, 1]} : vector<1x128xf32> to vector<1x32xf32>
    %33 = vector.extract_strided_slice %30 {offsets = [0, 64], sizes = [1, 32], strides = [1, 1]} : vector<1x128xf32> to vector<1x32xf32>
    %34 = vector.extract_strided_slice %29 {offsets = [0, 96], sizes = [1, 32], strides = [1, 1]} : vector<1x128xf32> to vector<1x32xf32>
    %35 = arith.mulf %32, %20 : vector<1x32xf32>
    %36 = arith.mulf %31, %33 : vector<1x32xf32>
    %37 = arith.addf %35, %36 : vector<1x32xf32>
    %38 = math.tanh %37 : vector<1x32xf32>
    %39 = arith.mulf %34, %38 : vector<1x32xf32>
    %40 = vector.extract_strided_slice %16 {offsets = [1, 0], sizes = [1, 128], strides = [1, 1]} : vector<8x128xf32> to vector<1x128xf32>
    %41 = arith.truncf %39 : vector<1x32xf32> to vector<1x32xbf16>
    %cst_14 = arith.constant dense<0.000000e+00> : vector<1x128xf32>
    %42 = tpu.matmul %41, %18, %cst_14 {dimension_numbers = #tpu.dot_dimension_numbers<[1], [0], [0], [1], [0, 0, 1, 1], [], []>} : vector<1x32xbf16>, vector<32x128xbf16>, vector<1x128xf32> -> vector<1x128xf32>
    %43 = arith.addf %40, %42 : vector<1x128xf32>
    %44 = arith.negf %43 : vector<1x128xf32>
    %45 = math.exp %44 : vector<1x128xf32>
    %cst_15 = arith.constant 1.000000e+00 : f32
    %46 = vector.broadcast %cst_15 : f32 to vector<1x128xf32>
    %47 = arith.addf %46, %45 : vector<1x128xf32>
    %48 = arith.divf %46, %47 : vector<1x128xf32>
    %49 = math.tanh %43 : vector<1x128xf32>
    %50 = vector.extract_strided_slice %48 {offsets = [0, 0], sizes = [1, 32], strides = [1, 1]} : vector<1x128xf32> to vector<1x32xf32>
    %51 = vector.extract_strided_slice %48 {offsets = [0, 32], sizes = [1, 32], strides = [1, 1]} : vector<1x128xf32> to vector<1x32xf32>
    %52 = vector.extract_strided_slice %49 {offsets = [0, 64], sizes = [1, 32], strides = [1, 1]} : vector<1x128xf32> to vector<1x32xf32>
    %53 = vector.extract_strided_slice %48 {offsets = [0, 96], sizes = [1, 32], strides = [1, 1]} : vector<1x128xf32> to vector<1x32xf32>
    %54 = arith.mulf %51, %37 : vector<1x32xf32>
    %55 = arith.mulf %50, %52 : vector<1x32xf32>
    %56 = arith.addf %54, %55 : vector<1x32xf32>
    %57 = math.tanh %56 : vector<1x32xf32>
    %58 = arith.mulf %53, %57 : vector<1x32xf32>
    %59 = vector.extract_strided_slice %16 {offsets = [2, 0], sizes = [1, 128], strides = [1, 1]} : vector<8x128xf32> to vector<1x128xf32>
    %60 = arith.truncf %58 : vector<1x32xf32> to vector<1x32xbf16>
    %cst_16 = arith.constant dense<0.000000e+00> : vector<1x128xf32>
    %61 = tpu.matmul %60, %18, %cst_16 {dimension_numbers = #tpu.dot_dimension_numbers<[1], [0], [0], [1], [0, 0, 1, 1], [], []>} : vector<1x32xbf16>, vector<32x128xbf16>, vector<1x128xf32> -> vector<1x128xf32>
    %62 = arith.addf %59, %61 : vector<1x128xf32>
    %63 = arith.negf %62 : vector<1x128xf32>
    %64 = math.exp %63 : vector<1x128xf32>
    %cst_17 = arith.constant 1.000000e+00 : f32
    %65 = vector.broadcast %cst_17 : f32 to vector<1x128xf32>
    %66 = arith.addf %65, %64 : vector<1x128xf32>
    %67 = arith.divf %65, %66 : vector<1x128xf32>
    %68 = math.tanh %62 : vector<1x128xf32>
    %69 = vector.extract_strided_slice %67 {offsets = [0, 0], sizes = [1, 32], strides = [1, 1]} : vector<1x128xf32> to vector<1x32xf32>
    %70 = vector.extract_strided_slice %67 {offsets = [0, 32], sizes = [1, 32], strides = [1, 1]} : vector<1x128xf32> to vector<1x32xf32>
    %71 = vector.extract_strided_slice %68 {offsets = [0, 64], sizes = [1, 32], strides = [1, 1]} : vector<1x128xf32> to vector<1x32xf32>
    %72 = vector.extract_strided_slice %67 {offsets = [0, 96], sizes = [1, 32], strides = [1, 1]} : vector<1x128xf32> to vector<1x32xf32>
    %73 = arith.mulf %70, %56 : vector<1x32xf32>
    %74 = arith.mulf %69, %71 : vector<1x32xf32>
    %75 = arith.addf %73, %74 : vector<1x32xf32>
    %76 = math.tanh %75 : vector<1x32xf32>
    %77 = arith.mulf %72, %76 : vector<1x32xf32>
    %78 = vector.extract_strided_slice %16 {offsets = [3, 0], sizes = [1, 128], strides = [1, 1]} : vector<8x128xf32> to vector<1x128xf32>
    %79 = arith.truncf %77 : vector<1x32xf32> to vector<1x32xbf16>
    %cst_18 = arith.constant dense<0.000000e+00> : vector<1x128xf32>
    %80 = tpu.matmul %79, %18, %cst_18 {dimension_numbers = #tpu.dot_dimension_numbers<[1], [0], [0], [1], [0, 0, 1, 1], [], []>} : vector<1x32xbf16>, vector<32x128xbf16>, vector<1x128xf32> -> vector<1x128xf32>
    %81 = arith.addf %78, %80 : vector<1x128xf32>
    %82 = arith.negf %81 : vector<1x128xf32>
    %83 = math.exp %82 : vector<1x128xf32>
    %cst_19 = arith.constant 1.000000e+00 : f32
    %84 = vector.broadcast %cst_19 : f32 to vector<1x128xf32>
    %85 = arith.addf %84, %83 : vector<1x128xf32>
    %86 = arith.divf %84, %85 : vector<1x128xf32>
    %87 = math.tanh %81 : vector<1x128xf32>
    %88 = vector.extract_strided_slice %86 {offsets = [0, 0], sizes = [1, 32], strides = [1, 1]} : vector<1x128xf32> to vector<1x32xf32>
    %89 = vector.extract_strided_slice %86 {offsets = [0, 32], sizes = [1, 32], strides = [1, 1]} : vector<1x128xf32> to vector<1x32xf32>
    %90 = vector.extract_strided_slice %87 {offsets = [0, 64], sizes = [1, 32], strides = [1, 1]} : vector<1x128xf32> to vector<1x32xf32>
    %91 = vector.extract_strided_slice %86 {offsets = [0, 96], sizes = [1, 32], strides = [1, 1]} : vector<1x128xf32> to vector<1x32xf32>
    %92 = arith.mulf %89, %75 : vector<1x32xf32>
    %93 = arith.mulf %88, %90 : vector<1x32xf32>
    %94 = arith.addf %92, %93 : vector<1x32xf32>
    %95 = math.tanh %94 : vector<1x32xf32>
    %96 = arith.mulf %91, %95 : vector<1x32xf32>
    %97 = vector.extract_strided_slice %16 {offsets = [4, 0], sizes = [1, 128], strides = [1, 1]} : vector<8x128xf32> to vector<1x128xf32>
    %98 = arith.truncf %96 : vector<1x32xf32> to vector<1x32xbf16>
    %cst_20 = arith.constant dense<0.000000e+00> : vector<1x128xf32>
    %99 = tpu.matmul %98, %18, %cst_20 {dimension_numbers = #tpu.dot_dimension_numbers<[1], [0], [0], [1], [0, 0, 1, 1], [], []>} : vector<1x32xbf16>, vector<32x128xbf16>, vector<1x128xf32> -> vector<1x128xf32>
    %100 = arith.addf %97, %99 : vector<1x128xf32>
    %101 = arith.negf %100 : vector<1x128xf32>
    %102 = math.exp %101 : vector<1x128xf32>
    %cst_21 = arith.constant 1.000000e+00 : f32
    %103 = vector.broadcast %cst_21 : f32 to vector<1x128xf32>
    %104 = arith.addf %103, %102 : vector<1x128xf32>
    %105 = arith.divf %103, %104 : vector<1x128xf32>
    %106 = math.tanh %100 : vector<1x128xf32>
    %107 = vector.extract_strided_slice %105 {offsets = [0, 0], sizes = [1, 32], strides = [1, 1]} : vector<1x128xf32> to vector<1x32xf32>
    %108 = vector.extract_strided_slice %105 {offsets = [0, 32], sizes = [1, 32], strides = [1, 1]} : vector<1x128xf32> to vector<1x32xf32>
    %109 = vector.extract_strided_slice %106 {offsets = [0, 64], sizes = [1, 32], strides = [1, 1]} : vector<1x128xf32> to vector<1x32xf32>
    %110 = vector.extract_strided_slice %105 {offsets = [0, 96], sizes = [1, 32], strides = [1, 1]} : vector<1x128xf32> to vector<1x32xf32>
    %111 = arith.mulf %108, %94 : vector<1x32xf32>
    %112 = arith.mulf %107, %109 : vector<1x32xf32>
    %113 = arith.addf %111, %112 : vector<1x32xf32>
    %114 = math.tanh %113 : vector<1x32xf32>
    %115 = arith.mulf %110, %114 : vector<1x32xf32>
    %116 = vector.extract_strided_slice %16 {offsets = [5, 0], sizes = [1, 128], strides = [1, 1]} : vector<8x128xf32> to vector<1x128xf32>
    %117 = arith.truncf %115 : vector<1x32xf32> to vector<1x32xbf16>
    %cst_22 = arith.constant dense<0.000000e+00> : vector<1x128xf32>
    %118 = tpu.matmul %117, %18, %cst_22 {dimension_numbers = #tpu.dot_dimension_numbers<[1], [0], [0], [1], [0, 0, 1, 1], [], []>} : vector<1x32xbf16>, vector<32x128xbf16>, vector<1x128xf32> -> vector<1x128xf32>
    %119 = arith.addf %116, %118 : vector<1x128xf32>
    %120 = arith.negf %119 : vector<1x128xf32>
    %121 = math.exp %120 : vector<1x128xf32>
    %cst_23 = arith.constant 1.000000e+00 : f32
    %122 = vector.broadcast %cst_23 : f32 to vector<1x128xf32>
    %123 = arith.addf %122, %121 : vector<1x128xf32>
    %124 = arith.divf %122, %123 : vector<1x128xf32>
    %125 = math.tanh %119 : vector<1x128xf32>
    %126 = vector.extract_strided_slice %124 {offsets = [0, 0], sizes = [1, 32], strides = [1, 1]} : vector<1x128xf32> to vector<1x32xf32>
    %127 = vector.extract_strided_slice %124 {offsets = [0, 32], sizes = [1, 32], strides = [1, 1]} : vector<1x128xf32> to vector<1x32xf32>
    %128 = vector.extract_strided_slice %125 {offsets = [0, 64], sizes = [1, 32], strides = [1, 1]} : vector<1x128xf32> to vector<1x32xf32>
    %129 = vector.extract_strided_slice %124 {offsets = [0, 96], sizes = [1, 32], strides = [1, 1]} : vector<1x128xf32> to vector<1x32xf32>
    %130 = arith.mulf %127, %113 : vector<1x32xf32>
    %131 = arith.mulf %126, %128 : vector<1x32xf32>
    %132 = arith.addf %130, %131 : vector<1x32xf32>
    %133 = math.tanh %132 : vector<1x32xf32>
    %134 = arith.mulf %129, %133 : vector<1x32xf32>
    %135 = vector.extract_strided_slice %16 {offsets = [6, 0], sizes = [1, 128], strides = [1, 1]} : vector<8x128xf32> to vector<1x128xf32>
    %136 = arith.truncf %134 : vector<1x32xf32> to vector<1x32xbf16>
    %cst_24 = arith.constant dense<0.000000e+00> : vector<1x128xf32>
    %137 = tpu.matmul %136, %18, %cst_24 {dimension_numbers = #tpu.dot_dimension_numbers<[1], [0], [0], [1], [0, 0, 1, 1], [], []>} : vector<1x32xbf16>, vector<32x128xbf16>, vector<1x128xf32> -> vector<1x128xf32>
    %138 = arith.addf %135, %137 : vector<1x128xf32>
    %139 = arith.negf %138 : vector<1x128xf32>
    %140 = math.exp %139 : vector<1x128xf32>
    %cst_25 = arith.constant 1.000000e+00 : f32
    %141 = vector.broadcast %cst_25 : f32 to vector<1x128xf32>
    %142 = arith.addf %141, %140 : vector<1x128xf32>
    %143 = arith.divf %141, %142 : vector<1x128xf32>
    %144 = math.tanh %138 : vector<1x128xf32>
    %145 = vector.extract_strided_slice %143 {offsets = [0, 0], sizes = [1, 32], strides = [1, 1]} : vector<1x128xf32> to vector<1x32xf32>
    %146 = vector.extract_strided_slice %143 {offsets = [0, 32], sizes = [1, 32], strides = [1, 1]} : vector<1x128xf32> to vector<1x32xf32>
    %147 = vector.extract_strided_slice %144 {offsets = [0, 64], sizes = [1, 32], strides = [1, 1]} : vector<1x128xf32> to vector<1x32xf32>
    %148 = vector.extract_strided_slice %143 {offsets = [0, 96], sizes = [1, 32], strides = [1, 1]} : vector<1x128xf32> to vector<1x32xf32>
    %149 = arith.mulf %146, %132 : vector<1x32xf32>
    %150 = arith.mulf %145, %147 : vector<1x32xf32>
    %151 = arith.addf %149, %150 : vector<1x32xf32>
    %152 = math.tanh %151 : vector<1x32xf32>
    %153 = arith.mulf %148, %152 : vector<1x32xf32>
    %154 = vector.extract_strided_slice %16 {offsets = [7, 0], sizes = [1, 128], strides = [1, 1]} : vector<8x128xf32> to vector<1x128xf32>
    %155 = arith.truncf %153 : vector<1x32xf32> to vector<1x32xbf16>
    %cst_26 = arith.constant dense<0.000000e+00> : vector<1x128xf32>
    %156 = tpu.matmul %155, %18, %cst_26 {dimension_numbers = #tpu.dot_dimension_numbers<[1], [0], [0], [1], [0, 0, 1, 1], [], []>} : vector<1x32xbf16>, vector<32x128xbf16>, vector<1x128xf32> -> vector<1x128xf32>
    %157 = arith.addf %154, %156 : vector<1x128xf32>
    %158 = arith.negf %157 : vector<1x128xf32>
    %159 = math.exp %158 : vector<1x128xf32>
    %cst_27 = arith.constant 1.000000e+00 : f32
    %160 = vector.broadcast %cst_27 : f32 to vector<1x128xf32>
    %161 = arith.addf %160, %159 : vector<1x128xf32>
    %162 = arith.divf %160, %161 : vector<1x128xf32>
    %163 = math.tanh %157 : vector<1x128xf32>
    %164 = vector.extract_strided_slice %162 {offsets = [0, 0], sizes = [1, 32], strides = [1, 1]} : vector<1x128xf32> to vector<1x32xf32>
    %165 = vector.extract_strided_slice %162 {offsets = [0, 32], sizes = [1, 32], strides = [1, 1]} : vector<1x128xf32> to vector<1x32xf32>
    %166 = vector.extract_strided_slice %163 {offsets = [0, 64], sizes = [1, 32], strides = [1, 1]} : vector<1x128xf32> to vector<1x32xf32>
    %167 = vector.extract_strided_slice %162 {offsets = [0, 96], sizes = [1, 32], strides = [1, 1]} : vector<1x128xf32> to vector<1x32xf32>
    %168 = arith.mulf %165, %151 : vector<1x32xf32>
    %169 = arith.mulf %164, %166 : vector<1x32xf32>
    %170 = arith.addf %168, %169 : vector<1x32xf32>
    %171 = math.tanh %170 : vector<1x32xf32>
    %172 = arith.mulf %167, %171 : vector<1x32xf32>
    %c0_28 = arith.constant 0 : index
    %c0_29 = arith.constant 0 : index
    %173 = vector.load %arg5[%c0_28, %c0_29] : memref<1x32xf32, #tpu.memory_space<vmem>>, vector<1x32xf32>
    tpu.vector_store %arg5[%c0_28, %c0_29], %172 {strides = array<i32>} : memref<1x32xf32, #tpu.memory_space<vmem>>, vector<1x32xf32>,
    return
  }
}

</mosaic_0001>

<llo_original>
// kernel: tpu_custom_call.1
$region0: #{tpu_custom_call.1}
  #allocation0 [shape = 'u32[]', space=smem, size = 0x4, offset = 0x4, fixed_abs, tag = 'smem constant byte address 0x4 - core index']
  #allocation1 [shape = 'u32[144,128]{1,0:T(1,128)}', space=vmem, size = 0x12000, scoped, tag = 'internal scratch']
  %s0 = inlined_call_operand.vmem [shape: s32[8,1], index: 0, kind: input, shape index: {}]
  %s1 = inlined_call_operand.hbm [shape: f32[16,32], index: 1, kind: input, shape index: {}]
  %s2 = inlined_call_operand.hbm [shape: f32[32,128], index: 2, kind: input, shape index: {}]
  %s3 = inlined_call_operand.hbm [shape: f32[32,128], index: 3, kind: input, shape index: {}]
  %s4 = inlined_call_operand.vmem [shape: f32[1,128], index: 4, kind: input, shape index: {}]
  %s5 = inlined_call_operand.hbm [shape: f32[1,32], index: 5, kind: output, shape index: {}]
  %s6 = sld [smem:[#allocation0]]
  $region42: #{tpu_custom_call.1} parent=0
    _
  %s8 = ssub.s32 1, %s6
  %s9 = scalar_select 0, %s8, %s6
  $region1: #{tpu_custom_call.1} parent=0
    #allocation2 [shape = 'u8[8192]{0}', space=vmem, size = 0x2000, scoped, tag = 'input window, operand 1, single buffered']
    #allocation3 [shape = 's32[1]{0}', space=sflag, size = 0x4, scoped, tag = 'scoped memory for tpu_custom_call.1']
    #allocation4 [shape = 's32[1]{0}', space=sflag, size = 0x4, scoped, tag = 'scoped memory for tpu_custom_call.1']
    #allocation5 [shape = 'u8[16384]{0}', space=vmem, size = 0x4000, scoped, tag = 'input window, operand 2, single buffered']
    #allocation6 [shape = 's32[1]{0}', space=sflag, size = 0x4, scoped, tag = 'scoped memory for tpu_custom_call.1']
    #allocation7 [shape = 'u8[16384]{0}', space=vmem, size = 0x4000, scoped, tag = 'input window, operand 3, single buffered']
    #allocation8 [shape = 'u8[512]{0}', space=vmem, size = 0x400, scoped, tag = 'output window, operand 0, single buffered']
    %10 = vsyncpa [#allocation3], 0
    %11 = vsyncpa [#allocation6], 0
    %12 = vsyncpa [#allocation4], 0
    // Predicated region
    $region2: #{tpu_custom_call.1} parent=1 // pred_check
      _
    $region3: #{tpu_custom_call.1} parent=1 // pred_check_branch
      %14 = sbr.rel (0) target = $region5
    $region4: #{tpu_custom_call.1} parent=1 // pred_region
      _
    $region5: #{tpu_custom_call.1} parent=1 // pred_fallthru
      _
    // Predicated region
    $region6: #{tpu_custom_call.1} parent=1 // pred_check
      _
    $region7: #{tpu_custom_call.1} parent=1 // pred_check_branch
      %16 = sbr.rel (0) target = $region9
    $region8: #{tpu_custom_call.1} parent=1 // pred_region
      %s18 = ssub.s32 256, 256
      %19 = vsyncadd [#allocation3], %s18
      %s20 = sshll.u32 [#allocation2], 4
      %s21 = int_to_ptr.vmem [resolvable:$true] %s20
      %26 = dma.hbm_to_vmem [thread:$0]  %s1, 256, %s21, [#allocation3], 128, 128, 8
    $region9: #{tpu_custom_call.1} parent=1 // pred_fallthru
      _
    // Predicated region
    $region10: #{tpu_custom_call.1} parent=1 // pred_check
      _
    $region11: #{tpu_custom_call.1} parent=1 // pred_check_branch
      %28 = sbr.rel (0) target = $region13
    $region12: #{tpu_custom_call.1} parent=1 // pred_region
      %s30 = ssub.s32 512, 512
      %31 = vsyncadd [#allocation6], %s30
      %s32 = sshll.u32 [#allocation5], 4
      %s33 = int_to_ptr.vmem [resolvable:$true] %s32
      %38 = dma.hbm_to_vmem [thread:$0]  %s2, 512, %s33, [#allocation6], 128, 128, 8
    $region13: #{tpu_custom_call.1} parent=1 // pred_fallthru
      _
    // Predicated region
    $region14: #{tpu_custom_call.1} parent=1 // pred_check
      _
    $region15: #{tpu_custom_call.1} parent=1 // pred_check_branch
      %40 = sbr.rel (0) target = $region17
    $region16: #{tpu_custom_call.1} parent=1 // pred_region
      %s42 = ssub.s32 512, 512
      %43 = vsyncadd [#allocation6], %s42
      %s44 = sshll.u32 [#allocation7], 4
      %s45 = int_to_ptr.vmem [resolvable:$true] %s44
      %50 = dma.hbm_to_vmem [thread:$0]  %s3, 512, %s45, [#allocation6], 128, 128, 8
    $region17: #{tpu_custom_call.1} parent=1 // pred_fallthru
      _
    // Predicated region
    $region18: #{tpu_custom_call.1} parent=1 // pred_check
      _
    $region19: #{tpu_custom_call.1} parent=1 // pred_check_branch
      %52 = sbr.rel (0) target = $region21
    $region20: #{tpu_custom_call.1} parent=1 // pred_region
      _
    $region21: #{tpu_custom_call.1} parent=1 // pred_fallthru
      _
    // Predicated region
    $region22: #{tpu_custom_call.1} parent=1 // pred_check
      _
    $region23: #{tpu_custom_call.1} parent=1 // pred_check_branch
      %54 = sbr.rel (0) target = $region25
    $region24: #{tpu_custom_call.1} parent=1 // pred_region
      %55 = dma.done [#allocation3], 256
    $region25: #{tpu_custom_call.1} parent=1 // pred_fallthru
      _
    // Predicated region
    $region26: #{tpu_custom_call.1} parent=1 // pred_check
      _
    $region27: #{tpu_custom_call.1} parent=1 // pred_check_branch
      %57 = sbr.rel (0) target = $region29
    $region28: #{tpu_custom_call.1} parent=1 // pred_region
      %58 = dma.done [#allocation6], 512
    $region29: #{tpu_custom_call.1} parent=1 // pred_fallthru
      _
    // Predicated region
    $region30: #{tpu_custom_call.1} parent=1 // pred_check
      _
    $region31: #{tpu_custom_call.1} parent=1 // pred_check_branch
      %60 = sbr.rel (0) target = $region33
    $region32: #{tpu_custom_call.1} parent=1 // pred_region
      %61 = dma.done [#allocation6], 512
    $region33: #{tpu_custom_call.1} parent=1 // pred_fallthru
      _
    %v63 = vld [vmem:[%s0] sm:$0xff]
    %v64 = vlaneseq
    %v65 = vand.u32 %v64, 127
    %66 = vset.pattern.permute.xlu0 0
    %67 = vperm.xlu0 %66, %v63
    %v68 = vpop.permute.xlu0 %67
    %vm69 = vcmp.eq.s32.totalorder %v65, %v68
    %v70 = vsel %vm69, 1, 0
    %v71 = vcvt.s32.f32 %v70
    %v72 = vpack.c.bf16 %v71, %v71
    %v73 = vld [vmem:[#allocation2] sm:$0xff]
    %v74 = vld [vmem:[#allocation2 + $0x8] sm:$0xff]
    %v75 = vpack.c.bf16 %v74, %v73
    %vm76 = vcmask 130048
    %v78 = vsel %vm76, %v72, 0
    %80 = vmatprep.subr.bf16.mxu0 0
    %81 = vmatpush1.bf16.msra.mxu0 %v75
    %82 = vmatprep.subr.bf16.mxu0 0
    %83 = vmatpush1.bf16.msra.mxu0 0
    %84 = vmatprep.subr.bf16.mxu0 0
    %85 = vmatpush1.bf16.msra.mxu0 0
    %86 = vmatprep.subr.bf16.mxu0 0
    %87 = vmatpush1.bf16.msra.mxu0 0
    %88 = vmatprep.subr.bf16.mxu0 0
    %89 = vmatpush1.bf16.msra.mxu0 0
    %90 = vmatprep.subr.bf16.mxu0 0
    %91 = vmatpush1.bf16.msra.mxu0 0
    %92 = vmatprep.subr.bf16.mxu0 0
    %93 = vmatpush1.bf16.msra.mxu0 0
    %94 = vmatprep.subr.bf16.mxu0 0
    %95 = vmatpush1.bf16.msra.mxu0 0
    %96 = vmatprep.subr.bf16.mxu0 0
    %97 = vmatpush1.bf16.msra.mxu0 0
    %98 = vmatprep.subr.bf16.mxu0 0
    %99 = vmatpush1.bf16.msra.mxu0 0
    %100 = vmatprep.subr.bf16.mxu0 0
    %101 = vmatpush1.bf16.msra.mxu0 0
    %102 = vmatprep.subr.bf16.mxu0 0
    %103 = vmatpush1.bf16.msra.mxu0 0
    %104 = vmatprep.subr.bf16.mxu0 0
    %105 = vmatpush1.bf16.msra.mxu0 0
    %106 = vmatprep.subr.bf16.mxu0 0
    %107 = vmatpush1.bf16.msra.mxu0 0
    %108 = vmatprep.subr.bf16.mxu0 0
    %109 = vmatpush1.bf16.msra.mxu0 0
    %110 = vmatprep.subr.bf16.mxu0 0
    %111 = vmatpush1.bf16.msra.mxu0 0
    %112 = vmatprep.mubr.bf16.mxu0 0
    %113 = vmatmul.mubr.bf16.gmra.mrb[0].mxu0 %v78
    %v114 = vpop.f32.mrb[0].mxu0
    %v115 = vadd.f32 0.0, %v114
    %v116 = vpop.f32.mrb[0].mxu0
    %v117 = vpop.f32.mrb[0].mxu0
    %v118 = vpop.f32.mrb[0].mxu0
    %119 = vdwg.mxu0
    %v120 = vpack.c.bf16 %v115, %v115
    %v121 = vld [vmem:[#allocation5] sm:$0xff]
    %v122 = vld [vmem:[#allocation5 + $0x8] sm:$0xff]
    %v123 = vld [vmem:[#allocation5 + $0x10] sm:$0xff]
    %v124 = vld [vmem:[#allocation5 + $0x18] sm:$0xff]
    %v125 = vpack.c.bf16 %v122, %v121
    %v126 = vpack.c.bf16 %v124, %v123
    %v127 = vld [vmem:[%s4] sm:$0x1]
    %v129 = vlaneseq
    %v130 = vshrl.u32 %v129, 7
    %v131 = vsub.s32 0, %v130
    %v132 = vrot.slane %v127, %v131
    %vm134 = vcmask 261120
    %v136 = vsel %vm134, %v120, 0
    %138 = vmatprep.subr.bf16.mxu0 0
    %139 = vmatpush1.bf16.msra.mxu0 %v125
    %140 = vmatprep.subr.bf16.mxu0 0
    %141 = vmatpush1.bf16.msra.mxu0 %v126
    %142 = vmatprep.subr.bf16.mxu0 0
    %143 = vmatpush1.bf16.msra.mxu0 0
    %144 = vmatprep.subr.bf16.mxu0 0
    %145 = vmatpush1.bf16.msra.mxu0 0
    %146 = vmatprep.subr.bf16.mxu0 0
    %147 = vmatpush1.bf16.msra.mxu0 0
    %148 = vmatprep.subr.bf16.mxu0 0
    %149 = vmatpush1.bf16.msra.mxu0 0
    %150 = vmatprep.subr.bf16.mxu0 0
    %151 = vmatpush1.bf16.msra.mxu0 0
    %152 = vmatprep.subr.bf16.mxu0 0
    %153 = vmatpush1.bf16.msra.mxu0 0
    %154 = vmatprep.subr.bf16.mxu0 0
    %155 = vmatpush1.bf16.msra.mxu0 0
    %156 = vmatprep.subr.bf16.mxu0 0
    %157 = vmatpush1.bf16.msra.mxu0 0
    %158 = vmatprep.subr.bf16.mxu0 0
    %159 = vmatpush1.bf16.msra.mxu0 0
    %160 = vmatprep.subr.bf16.mxu0 0
    %161 = vmatpush1.bf16.msra.mxu0 0
    %162 = vmatprep.subr.bf16.mxu0 0
    %163 = vmatpush1.bf16.msra.mxu0 0
    %164 = vmatprep.subr.bf16.mxu0 0
    %165 = vmatpush1.bf16.msra.mxu0 0
    %166 = vmatprep.subr.bf16.mxu0 0
    %167 = vmatpush1.bf16.msra.mxu0 0
    %168 = vmatprep.subr.bf16.mxu0 0
    %169 = vmatpush1.bf16.msra.mxu0 0
    %170 = vmatprep.mubr.bf16.mxu0 0
    %171 = vmatmul.mubr.bf16.gmra.mrb[0].mxu0 %v136
    %v172 = vpop.f32.mrb[0].mxu0
    %v173 = vadd.f32 %v132, %v172
    %v174 = vpop.f32.mrb[0].mxu0
    %v175 = vpop.f32.mrb[0].mxu0
    %v176 = vpop.f32.mrb[0].mxu0
    %177 = vdwg.mxu0
    %v178 = vld [vmem:[#allocation7] sm:$0xff]
    %v179 = vld [vmem:[#allocation7 + $0x8] sm:$0xff]
    %v180 = vld [vmem:[#allocation7 + $0x10] sm:$0xff]
    %v181 = vld [vmem:[#allocation7 + $0x18] sm:$0xff]
    %v182 = vpack.c.bf16 %v179, %v178
    %v183 = vpack.c.bf16 %v181, %v180
    %v185 = vsel %vm134, 0, 0
    %187 = vmatprep.subr.bf16.mxu0 0
    %188 = vmatpush1.bf16.msra.mxu0 %v182
    %189 = vmatprep.subr.bf16.mxu0 0
    %190 = vmatpush1.bf16.msra.mxu0 %v183
    %191 = vmatprep.subr.bf16.mxu0 0
    %192 = vmatpush1.bf16.msra.mxu0 0
    %193 = vmatprep.subr.bf16.mxu0 0
    %194 = vmatpush1.bf16.msra.mxu0 0
    %195 = vmatprep.subr.bf16.mxu0 0
    %196 = vmatpush1.bf16.msra.mxu0 0
    %197 = vmatprep.subr.bf16.mxu0 0
    %198 = vmatpush1.bf16.msra.mxu0 0
    %199 = vmatprep.subr.bf16.mxu0 0
    %200 = vmatpush1.bf16.msra.mxu0 0
    %201 = vmatprep.subr.bf16.mxu0 0
    %202 = vmatpush1.bf16.msra.mxu0 0
    %203 = vmatprep.subr.bf16.mxu0 0
    %204 = vmatpush1.bf16.msra.mxu0 0
    %205 = vmatprep.subr.bf16.mxu0 0
    %206 = vmatpush1.bf16.msra.mxu0 0
    %207 = vmatprep.subr.bf16.mxu0 0
    %208 = vmatpush1.bf16.msra.mxu0 0
    %209 = vmatprep.subr.bf16.mxu0 0
    %210 = vmatpush1.bf16.msra.mxu0 0
    %211 = vmatprep.subr.bf16.mxu0 0
    %212 = vmatpush1.bf16.msra.mxu0 0
    %213 = vmatprep.subr.bf16.mxu0 0
    %214 = vmatpush1.bf16.msra.mxu0 0
    %215 = vmatprep.subr.bf16.mxu0 0
    %216 = vmatpush1.bf16.msra.mxu0 0
    %217 = vmatprep.subr.bf16.mxu0 0
    %218 = vmatpush1.bf16.msra.mxu0 0
    %219 = vmatprep.mubr.bf16.mxu0 0
    %220 = vmatmul.mubr.bf16.gmra.mrb[0].mxu0 %v185
    %v221 = vpop.f32.mrb[0].mxu0
    %v222 = vadd.f32 0.0, %v221
    %v223 = vpop.f32.mrb[0].mxu0
    %v224 = vpop.f32.mrb[0].mxu0
    %v225 = vpop.f32.mrb[0].mxu0
    %226 = vdwg.mxu0
    %v227 = vadd.f32 %v173, %v222
    %v228 = vxor.u32 %v227, 2147483648
    %v229 = vmul.f32 %v228, 1.442695
    %v230 = vpow.pop %v229
    %v231 = vadd.f32 %v230, 1.0
    %v232 = vrcp.pop %v231
    %v233 = vmul.f32 1.0, %v232
    %v234 = vtanh.pop %v227
    %v235 = vmul.f32 %v233, 0.0
    %237 = vrot.lane.b32.xlu0 %v234, 64
    %v238 = vpop.permute.xlu0 %237
    %v240 = vmul.f32 %v233, %v238
    %242 = vrot.lane.b32.xlu0 %v240, 32
    %v243 = vpop.permute.xlu0 %242
    %v245 = vadd.f32 %v235, %v243
    %v246 = vtanh.pop %v245
    %248 = vrot.lane.b32.xlu0 %v246, 64
    %v249 = vpop.permute.xlu0 %248
    %v251 = vmul.f32 %v233, %v249
    %v252 = vpack.c.bf16 %v251, %v251
    %254 = vrot.lane.b32.xlu0 %v252, 32
    %v255 = vpop.permute.xlu0 %254
    %v257 = vsel %vm134, %v255, 0
    %259 = vmatprep.subr.bf16.mxu0 0
    %260 = vmatpush1.bf16.msra.mxu0 %v182
    %261 = vmatprep.subr.bf16.mxu0 0
    %262 = vmatpush1.bf16.msra.mxu0 %v183
    %263 = vmatprep.subr.bf16.mxu0 0
    %264 = vmatpush1.bf16.msra.mxu0 0
    %265 = vmatprep.subr.bf16.mxu0 0
    %266 = vmatpush1.bf16.msra.mxu0 0
    %267 = vmatprep.subr.bf16.mxu0 0
    %268 = vmatpush1.bf16.msra.mxu0 0
    %269 = vmatprep.subr.bf16.mxu0 0
    %270 = vmatpush1.bf16.msra.mxu0 0
    %271 = vmatprep.subr.bf16.mxu0 0
    %272 = vmatpush1.bf16.msra.mxu0 0
    %273 = vmatprep.subr.bf16.mxu0 0
    %274 = vmatpush1.bf16.msra.mxu0 0
    %275 = vmatprep.subr.bf16.mxu0 0
    %276 = vmatpush1.bf16.msra.mxu0 0
    %277 = vmatprep.subr.bf16.mxu0 0
    %278 = vmatpush1.bf16.msra.mxu0 0
    %279 = vmatprep.subr.bf16.mxu0 0
    %280 = vmatpush1.bf16.msra.mxu0 0
    %281 = vmatprep.subr.bf16.mxu0 0
    %282 = vmatpush1.bf16.msra.mxu0 0
    %283 = vmatprep.subr.bf16.mxu0 0
    %284 = vmatpush1.bf16.msra.mxu0 0
    %285 = vmatprep.subr.bf16.mxu0 0
    %286 = vmatpush1.bf16.msra.mxu0 0
    %287 = vmatprep.subr.bf16.mxu0 0
    %288 = vmatpush1.bf16.msra.mxu0 0
    %289 = vmatprep.subr.bf16.mxu0 0
    %290 = vmatpush1.bf16.msra.mxu0 0
    %291 = vmatprep.mubr.bf16.mxu0 0
    %292 = vmatmul.mubr.bf16.gmra.mrb[0].mxu0 %v257
    %v293 = vpop.f32.mrb[0].mxu0
    %v294 = vadd.f32 0.0, %v293
    %v295 = vpop.f32.mrb[0].mxu0
    %v296 = vpop.f32.mrb[0].mxu0
    %v297 = vpop.f32.mrb[0].mxu0
    %298 = vdwg.mxu0
    %v300 = vrot.slane %v294, 7
    %v302 = vadd.f32 %v173, %v300
    %v303 = vxor.u32 %v302, 2147483648
    %v304 = vmul.f32 %v303, 1.442695
    %v305 = vpow.pop %v304
    %v306 = vadd.f32 %v305, 1.0
    %v307 = vrcp.pop %v306
    %v308 = vmul.f32 1.0, %v307
    %v309 = vtanh.pop %v302
    %v311 = vrot.slane %v245, 7
    %v313 = vmul.f32 %v308, %v311
    %315 = vrot.lane.b32.xlu0 %v309, 64
    %v316 = vpop.permute.xlu0 %315
    %v318 = vmul.f32 %v308, %v316
    %320 = vrot.lane.b32.xlu0 %v318, 32
    %v321 = vpop.permute.xlu0 %320
    %v323 = vadd.f32 %v313, %v321
    %v324 = vtanh.pop %v323
    %326 = vrot.lane.b32.xlu0 %v324, 64
    %v327 = vpop.permute.xlu0 %326
    %v329 = vmul.f32 %v308, %v327
    %v330 = vpack.c.bf16 %v329, %v329
    %v332 = vshrl.u32 %v330, 16
    %334 = vrot.lane.b32.xlu0 %v332, 32
    %v335 = vpop.permute.xlu0 %334
    %v337 = vsel %vm134, %v335, 0
    %339 = vmatprep.subr.bf16.mxu0 0
    %340 = vmatpush1.bf16.msra.mxu0 %v182
    %341 = vmatprep.subr.bf16.mxu0 0
    %342 = vmatpush1.bf16.msra.mxu0 %v183
    %343 = vmatprep.subr.bf16.mxu0 0
    %344 = vmatpush1.bf16.msra.mxu0 0
    %345 = vmatprep.subr.bf16.mxu0 0
    %346 = vmatpush1.bf16.msra.mxu0 0
    %347 = vmatprep.subr.bf16.mxu0 0
    %348 = vmatpush1.bf16.msra.mxu0 0
    %349 = vmatprep.subr.bf16.mxu0 0
    %350 = vmatpush1.bf16.msra.mxu0 0
    %351 = vmatprep.subr.bf16.mxu0 0
    %352 = vmatpush1.bf16.msra.mxu0 0
    %353 = vmatprep.subr.bf16.mxu0 0
    %354 = vmatpush1.bf16.msra.mxu0 0
    %355 = vmatprep.subr.bf16.mxu0 0
    %356 = vmatpush1.bf16.msra.mxu0 0
    %357 = vmatprep.subr.bf16.mxu0 0
    %358 = vmatpush1.bf16.msra.mxu0 0
    %359 = vmatprep.subr.bf16.mxu0 0
    %360 = vmatpush1.bf16.msra.mxu0 0
    %361 = vmatprep.subr.bf16.mxu0 0
    %362 = vmatpush1.bf16.msra.mxu0 0
    %363 = vmatprep.subr.bf16.mxu0 0
    %364 = vmatpush1.bf16.msra.mxu0 0
    %365 = vmatprep.subr.bf16.mxu0 0
    %366 = vmatpush1.bf16.msra.mxu0 0
    %367 = vmatprep.subr.bf16.mxu0 0
    %368 = vmatpush1.bf16.msra.mxu0 0
    %369 = vmatprep.subr.bf16.mxu0 0
    %370 = vmatpush1.bf16.msra.mxu0 0
    %371 = vmatprep.mubr.bf16.mxu0 0
    %372 = vmatmul.mubr.bf16.gmra.mrb[0].mxu0 %v337
    %v373 = vpop.f32.mrb[0].mxu0
    %v374 = vadd.f32 0.0, %v373
    %v375 = vpop.f32.mrb[0].mxu0
    %v376 = vpop.f32.mrb[0].mxu0
    %v377 = vpop.f32.mrb[0].mxu0
    %378 = vdwg.mxu0
    %v380 = vrot.slane %v374, 6
    %v382 = vadd.f32 %v173, %v380
    %v383 = vxor.u32 %v382, 2147483648
    %v384 = vmul.f32 %v383, 1.442695
    %v385 = vpow.pop %v384
    %v386 = vadd.f32 %v385, 1.0
    %v387 = vrcp.pop %v386
    %v388 = vmul.f32 1.0, %v387
    %v389 = vtanh.pop %v382
    %v391 = vrot.slane %v323, 7
    %v393 = vmul.f32 %v388, %v391
    %395 = vrot.lane.b32.xlu0 %v389, 64
    %v396 = vpop.permute.xlu0 %395
    %v398 = vmul.f32 %v388, %v396
    %400 = vrot.lane.b32.xlu0 %v398, 32
    %v401 = vpop.permute.xlu0 %400
    %v403 = vadd.f32 %v393, %v401
    %v404 = vtanh.pop %v403
    %406 = vrot.lane.b32.xlu0 %v404, 64
    %v407 = vpop.permute.xlu0 %406
    %v409 = vmul.f32 %v388, %v407
    %v410 = vpack.c.bf16 %v409, %v409
    %v412 = vrot.slane %v410, 1
    %413 = vrot.lane.b32.xlu0 %v412, 32
    %v414 = vpop.permute.xlu0 %413
    %v416 = vsel %vm134, %v414, 0
    %418 = vmatprep.subr.bf16.mxu0 0
    %419 = vmatpush1.bf16.msra.mxu0 %v182
    %420 = vmatprep.subr.bf16.mxu0 0
    %421 = vmatpush1.bf16.msra.mxu0 %v183
    %422 = vmatprep.subr.bf16.mxu0 0
    %423 = vmatpush1.bf16.msra.mxu0 0
    %424 = vmatprep.subr.bf16.mxu0 0
    %425 = vmatpush1.bf16.msra.mxu0 0
    %426 = vmatprep.subr.bf16.mxu0 0
    %427 = vmatpush1.bf16.msra.mxu0 0
    %428 = vmatprep.subr.bf16.mxu0 0
    %429 = vmatpush1.bf16.msra.mxu0 0
    %430 = vmatprep.subr.bf16.mxu0 0
    %431 = vmatpush1.bf16.msra.mxu0 0
    %432 = vmatprep.subr.bf16.mxu0 0
    %433 = vmatpush1.bf16.msra.mxu0 0
    %434 = vmatprep.subr.bf16.mxu0 0
    %435 = vmatpush1.bf16.msra.mxu0 0
    %436 = vmatprep.subr.bf16.mxu0 0
    %437 = vmatpush1.bf16.msra.mxu0 0
    %438 = vmatprep.subr.bf16.mxu0 0
    %439 = vmatpush1.bf16.msra.mxu0 0
    %440 = vmatprep.subr.bf16.mxu0 0
    %441 = vmatpush1.bf16.msra.mxu0 0
    %442 = vmatprep.subr.bf16.mxu0 0
    %443 = vmatpush1.bf16.msra.mxu0 0
    %444 = vmatprep.subr.bf16.mxu0 0
    %445 = vmatpush1.bf16.msra.mxu0 0
    %446 = vmatprep.subr.bf16.mxu0 0
    %447 = vmatpush1.bf16.msra.mxu0 0
    %448 = vmatprep.subr.bf16.mxu0 0
    %449 = vmatpush1.bf16.msra.mxu0 0
    %450 = vmatprep.mubr.bf16.mxu0 0
    %451 = vmatmul.mubr.bf16.gmra.mrb[0].mxu0 %v416
    %v452 = vpop.f32.mrb[0].mxu0
    %v453 = vadd.f32 0.0, %v452
    %v454 = vpop.f32.mrb[0].mxu0
    %v455 = vpop.f32.mrb[0].mxu0
    %v456 = vpop.f32.mrb[0].mxu0
    %457 = vdwg.mxu0
    %v459 = vrot.slane %v453, 5
    %v461 = vadd.f32 %v173, %v459
    %v462 = vxor.u32 %v461, 2147483648
    %v463 = vmul.f32 %v462, 1.442695
    %v464 = vpow.pop %v463
    %v465 = vadd.f32 %v464, 1.0
    %v466 = vrcp.pop %v465
    %v467 = vmul.f32 1.0, %v466
    %v468 = vtanh.pop %v461
    %v470 = vrot.slane %v403, 7
    %v472 = vmul.f32 %v467, %v470
    %474 = vrot.lane.b32.xlu0 %v468, 64
    %v475 = vpop.permute.xlu0 %474
    %v477 = vmul.f32 %v467, %v475
    %479 = vrot.lane.b32.xlu0 %v477, 32
    %v480 = vpop.permute.xlu0 %479
    %v482 = vadd.f32 %v472, %v480
    %v483 = vtanh.pop %v482
    %485 = vrot.lane.b32.xlu0 %v483, 64
    %v486 = vpop.permute.xlu0 %485
    %v488 = vmul.f32 %v467, %v486
    %v489 = vpack.c.bf16 %v488, %v488
    %v491 = vshrl.u32 %v489, 16
    %v493 = vrot.slane %v491, 1
    %494 = vrot.lane.b32.xlu0 %v493, 32
    %v495 = vpop.permute.xlu0 %494
    %v497 = vsel %vm134, %v495, 0
    %499 = vmatprep.subr.bf16.mxu0 0
    %500 = vmatpush1.bf16.msra.mxu0 %v182
    %501 = vmatprep.subr.bf16.mxu0 0
    %502 = vmatpush1.bf16.msra.mxu0 %v183
    %503 = vmatprep.subr.bf16.mxu0 0
    %504 = vmatpush1.bf16.msra.mxu0 0
    %505 = vmatprep.subr.bf16.mxu0 0
    %506 = vmatpush1.bf16.msra.mxu0 0
    %507 = vmatprep.subr.bf16.mxu0 0
    %508 = vmatpush1.bf16.msra.mxu0 0
    %509 = vmatprep.subr.bf16.mxu0 0
    %510 = vmatpush1.bf16.msra.mxu0 0
    %511 = vmatprep.subr.bf16.mxu0 0
    %512 = vmatpush1.bf16.msra.mxu0 0
    %513 = vmatprep.subr.bf16.mxu0 0
    %514 = vmatpush1.bf16.msra.mxu0 0
    %515 = vmatprep.subr.bf16.mxu0 0
    %516 = vmatpush1.bf16.msra.mxu0 0
    %517 = vmatprep.subr.bf16.mxu0 0
    %518 = vmatpush1.bf16.msra.mxu0 0
    %519 = vmatprep.subr.bf16.mxu0 0
    %520 = vmatpush1.bf16.msra.mxu0 0
    %521 = vmatprep.subr.bf16.mxu0 0
    %522 = vmatpush1.bf16.msra.mxu0 0
    %523 = vmatprep.subr.bf16.mxu0 0
    %524 = vmatpush1.bf16.msra.mxu0 0
    %525 = vmatprep.subr.bf16.mxu0 0
    %526 = vmatpush1.bf16.msra.mxu0 0
    %527 = vmatprep.subr.bf16.mxu0 0
    %528 = vmatpush1.bf16.msra.mxu0 0
    %529 = vmatprep.subr.bf16.mxu0 0
    %530 = vmatpush1.bf16.msra.mxu0 0
    %531 = vmatprep.mubr.bf16.mxu0 0
    %532 = vmatmul.mubr.bf16.gmra.mrb[0].mxu0 %v497
    %v533 = vpop.f32.mrb[0].mxu0
    %v534 = vadd.f32 0.0, %v533
    %v535 = vpop.f32.mrb[0].mxu0
    %v536 = vpop.f32.mrb[0].mxu0
    %v537 = vpop.f32.mrb[0].mxu0
    %538 = vdwg.mxu0
    %v540 = vrot.slane %v534, 4
    %v542 = vadd.f32 %v173, %v540
    %v543 = vxor.u32 %v542, 2147483648
    %v544 = vmul.f32 %v543, 1.442695
    %v545 = vpow.pop %v544
    %v546 = vadd.f32 %v545, 1.0
    %v547 = vrcp.pop %v546
    %v548 = vmul.f32 1.0, %v547
    %v549 = vtanh.pop %v542
    %v551 = vrot.slane %v482, 7
    %v553 = vmul.f32 %v548, %v551
    %555 = vrot.lane.b32.xlu0 %v549, 64
    %v556 = vpop.permute.xlu0 %555
    %v558 = vmul.f32 %v548, %v556
    %560 = vrot.lane.b32.xlu0 %v558, 32
    %v561 = vpop.permute.xlu0 %560
    %v563 = vadd.f32 %v553, %v561
    %v564 = vtanh.pop %v563
    %566 = vrot.lane.b32.xlu0 %v564, 64
    %v567 = vpop.permute.xlu0 %566
    %v569 = vmul.f32 %v548, %v567
    %v570 = vpack.c.bf16 %v569, %v569
    %v572 = vrot.slane %v570, 2
    %573 = vrot.lane.b32.xlu0 %v572, 32
    %v574 = vpop.permute.xlu0 %573
    %v576 = vsel %vm134, %v574, 0
    %578 = vmatprep.subr.bf16.mxu0 0
    %579 = vmatpush1.bf16.msra.mxu0 %v182
    %580 = vmatprep.subr.bf16.mxu0 0
    %581 = vmatpush1.bf16.msra.mxu0 %v183
    %582 = vmatprep.subr.bf16.mxu0 0
    %583 = vmatpush1.bf16.msra.mxu0 0
    %584 = vmatprep.subr.bf16.mxu0 0
    %585 = vmatpush1.bf16.msra.mxu0 0
    %586 = vmatprep.subr.bf16.mxu0 0
    %587 = vmatpush1.bf16.msra.mxu0 0
    %588 = vmatprep.subr.bf16.mxu0 0
    %589 = vmatpush1.bf16.msra.mxu0 0
    %590 = vmatprep.subr.bf16.mxu0 0
    %591 = vmatpush1.bf16.msra.mxu0 0
    %592 = vmatprep.subr.bf16.mxu0 0
    %593 = vmatpush1.bf16.msra.mxu0 0
    %594 = vmatprep.subr.bf16.mxu0 0
    %595 = vmatpush1.bf16.msra.mxu0 0
    %596 = vmatprep.subr.bf16.mxu0 0
    %597 = vmatpush1.bf16.msra.mxu0 0
    %598 = vmatprep.subr.bf16.mxu0 0
    %599 = vmatpush1.bf16.msra.mxu0 0
    %600 = vmatprep.subr.bf16.mxu0 0
    %601 = vmatpush1.bf16.msra.mxu0 0
    %602 = vmatprep.subr.bf16.mxu0 0
    %603 = vmatpush1.bf16.msra.mxu0 0
    %604 = vmatprep.subr.bf16.mxu0 0
    %605 = vmatpush1.bf16.msra.mxu0 0
    %606 = vmatprep.subr.bf16.mxu0 0
    %607 = vmatpush1.bf16.msra.mxu0 0
    %608 = vmatprep.subr.bf16.mxu0 0
    %609 = vmatpush1.bf16.msra.mxu0 0
    %610 = vmatprep.mubr.bf16.mxu0 0
    %611 = vmatmul.mubr.bf16.gmra.mrb[0].mxu0 %v576
    %v612 = vpop.f32.mrb[0].mxu0
    %v613 = vadd.f32 0.0, %v612
    %v614 = vpop.f32.mrb[0].mxu0
    %v615 = vpop.f32.mrb[0].mxu0
    %v616 = vpop.f32.mrb[0].mxu0
    %617 = vdwg.mxu0
    %v619 = vrot.slane %v613, 3
    %v621 = vadd.f32 %v173, %v619
    %v622 = vxor.u32 %v621, 2147483648
    %v623 = vmul.f32 %v622, 1.442695
    %v624 = vpow.pop %v623
    %v625 = vadd.f32 %v624, 1.0
    %v626 = vrcp.pop %v625
    %v627 = vmul.f32 1.0, %v626
    %v628 = vtanh.pop %v621
    %v630 = vrot.slane %v563, 7
    %v632 = vmul.f32 %v627, %v630
    %634 = vrot.lane.b32.xlu0 %v628, 64
    %v635 = vpop.permute.xlu0 %634
    %v637 = vmul.f32 %v627, %v635
    %639 = vrot.lane.b32.xlu0 %v637, 32
    %v640 = vpop.permute.xlu0 %639
    %v642 = vadd.f32 %v632, %v640
    %v643 = vtanh.pop %v642
    %645 = vrot.lane.b32.xlu0 %v643, 64
    %v646 = vpop.permute.xlu0 %645
    %v648 = vmul.f32 %v627, %v646
    %v649 = vpack.c.bf16 %v648, %v648
    %v651 = vshrl.u32 %v649, 16
    %v653 = vrot.slane %v651, 2
    %654 = vrot.lane.b32.xlu0 %v653, 32
    %v655 = vpop.permute.xlu0 %654
    %v657 = vsel %vm134, %v655, 0
    %659 = vmatprep.subr.bf16.mxu0 0
    %660 = vmatpush1.bf16.msra.mxu0 %v182
    %661 = vmatprep.subr.bf16.mxu0 0
    %662 = vmatpush1.bf16.msra.mxu0 %v183
    %663 = vmatprep.subr.bf16.mxu0 0
    %664 = vmatpush1.bf16.msra.mxu0 0
    %665 = vmatprep.subr.bf16.mxu0 0
    %666 = vmatpush1.bf16.msra.mxu0 0
    %667 = vmatprep.subr.bf16.mxu0 0
    %668 = vmatpush1.bf16.msra.mxu0 0
    %669 = vmatprep.subr.bf16.mxu0 0
    %670 = vmatpush1.bf16.msra.mxu0 0
    %671 = vmatprep.subr.bf16.mxu0 0
    %672 = vmatpush1.bf16.msra.mxu0 0
    %673 = vmatprep.subr.bf16.mxu0 0
    %674 = vmatpush1.bf16.msra.mxu0 0
    %675 = vmatprep.subr.bf16.mxu0 0
    %676 = vmatpush1.bf16.msra.mxu0 0
    %677 = vmatprep.subr.bf16.mxu0 0
    %678 = vmatpush1.bf16.msra.mxu0 0
    %679 = vmatprep.subr.bf16.mxu0 0
    %680 = vmatpush1.bf16.msra.mxu0 0
    %681 = vmatprep.subr.bf16.mxu0 0
    %682 = vmatpush1.bf16.msra.mxu0 0
    %683 = vmatprep.subr.bf16.mxu0 0
    %684 = vmatpush1.bf16.msra.mxu0 0
    %685 = vmatprep.subr.bf16.mxu0 0
    %686 = vmatpush1.bf16.msra.mxu0 0
    %687 = vmatprep.subr.bf16.mxu0 0
    %688 = vmatpush1.bf16.msra.mxu0 0
    %689 = vmatprep.subr.bf16.mxu0 0
    %690 = vmatpush1.bf16.msra.mxu0 0
    %691 = vmatprep.mubr.bf16.mxu0 0
    %692 = vmatmul.mubr.bf16.gmra.mrb[0].mxu0 %v657
    %v693 = vpop.f32.mrb[0].mxu0
    %v694 = vadd.f32 0.0, %v693
    %v695 = vpop.f32.mrb[0].mxu0
    %v696 = vpop.f32.mrb[0].mxu0
    %v697 = vpop.f32.mrb[0].mxu0
    %698 = vdwg.mxu0
    %v700 = vrot.slane %v694, 2
    %v702 = vadd.f32 %v173, %v700
    %v703 = vxor.u32 %v702, 2147483648
    %v704 = vmul.f32 %v703, 1.442695
    %v705 = vpow.pop %v704
    %v706 = vadd.f32 %v705, 1.0
    %v707 = vrcp.pop %v706
    %v708 = vmul.f32 1.0, %v707
    %v709 = vtanh.pop %v702
    %v711 = vrot.slane %v642, 7
    %v713 = vmul.f32 %v708, %v711
    %715 = vrot.lane.b32.xlu0 %v709, 64
    %v716 = vpop.permute.xlu0 %715
    %v718 = vmul.f32 %v708, %v716
    %720 = vrot.lane.b32.xlu0 %v718, 32
    %v721 = vpop.permute.xlu0 %720
    %v723 = vadd.f32 %v713, %v721
    %v724 = vtanh.pop %v723
    %726 = vrot.lane.b32.xlu0 %v724, 64
    %v727 = vpop.permute.xlu0 %726
    %v729 = vmul.f32 %v708, %v727
    %v730 = vpack.c.bf16 %v729, %v729
    %v732 = vrot.slane %v730, 3
    %733 = vrot.lane.b32.xlu0 %v732, 32
    %v734 = vpop.permute.xlu0 %733
    %v736 = vsel %vm134, %v734, 0
    %738 = vmatprep.subr.bf16.mxu0 0
    %739 = vmatpush1.bf16.msra.mxu0 %v182
    %740 = vmatprep.subr.bf16.mxu0 0
    %741 = vmatpush1.bf16.msra.mxu0 %v183
    %742 = vmatprep.subr.bf16.mxu0 0
    %743 = vmatpush1.bf16.msra.mxu0 0
    %744 = vmatprep.subr.bf16.mxu0 0
    %745 = vmatpush1.bf16.msra.mxu0 0
    %746 = vmatprep.subr.bf16.mxu0 0
    %747 = vmatpush1.bf16.msra.mxu0 0
    %748 = vmatprep.subr.bf16.mxu0 0
    %749 = vmatpush1.bf16.msra.mxu0 0
    %750 = vmatprep.subr.bf16.mxu0 0
    %751 = vmatpush1.bf16.msra.mxu0 0
    %752 = vmatprep.subr.bf16.mxu0 0
    %753 = vmatpush1.bf16.msra.mxu0 0
    %754 = vmatprep.subr.bf16.mxu0 0
    %755 = vmatpush1.bf16.msra.mxu0 0
    %756 = vmatprep.subr.bf16.mxu0 0
    %757 = vmatpush1.bf16.msra.mxu0 0
    %758 = vmatprep.subr.bf16.mxu0 0
    %759 = vmatpush1.bf16.msra.mxu0 0
    %760 = vmatprep.subr.bf16.mxu0 0
    %761 = vmatpush1.bf16.msra.mxu0 0
    %762 = vmatprep.subr.bf16.mxu0 0
    %763 = vmatpush1.bf16.msra.mxu0 0
    %764 = vmatprep.subr.bf16.mxu0 0
    %765 = vmatpush1.bf16.msra.mxu0 0
    %766 = vmatprep.subr.bf16.mxu0 0
    %767 = vmatpush1.bf16.msra.mxu0 0
    %768 = vmatprep.subr.bf16.mxu0 0
    %769 = vmatpush1.bf16.msra.mxu0 0
    %770 = vmatprep.mubr.bf16.mxu0 0
    %771 = vmatmul.mubr.bf16.gmra.mrb[0].mxu0 %v736
    %v772 = vpop.f32.mrb[0].mxu0
    %v773 = vadd.f32 0.0, %v772
    %v774 = vpop.f32.mrb[0].mxu0
    %v775 = vpop.f32.mrb[0].mxu0
    %v776 = vpop.f32.mrb[0].mxu0
    %777 = vdwg.mxu0
    %v779 = vrot.slane %v773, 1
    %v781 = vadd.f32 %v173, %v779
    %v782 = vxor.u32 %v781, 2147483648
    %v783 = vmul.f32 %v782, 1.442695
    %v784 = vpow.pop %v783
    %v785 = vadd.f32 %v784, 1.0
    %v786 = vrcp.pop %v785
    %v787 = vmul.f32 1.0, %v786
    %v788 = vtanh.pop %v781
    %v790 = vrot.slane %v723, 7
    %v792 = vmul.f32 %v787, %v790
    %794 = vrot.lane.b32.xlu0 %v788, 64
    %v795 = vpop.permute.xlu0 %794
    %v797 = vmul.f32 %v787, %v795
    %799 = vrot.lane.b32.xlu0 %v797, 32
    %v800 = vpop.permute.xlu0 %799
    %v802 = vadd.f32 %v792, %v800
    %v803 = vtanh.pop %v802
    %805 = vrot.lane.b32.xlu0 %v803, 64
    %v806 = vpop.permute.xlu0 %805
    %v808 = vmul.f32 %v787, %v806
    %810 = vrot.lane.b32.xlu0 %v808, 32
    %v811 = vpop.permute.xlu0 %810
    %vm813 = vcmask 261127
    %814 = vst.msk [vmem:[#allocation8 - $0x7] sm:$0x80] %vm813, %v811
    // Predicated region
    $region34: #{tpu_custom_call.1} parent=1 // pred_check
      _
    $region35: #{tpu_custom_call.1} parent=1 // pred_check_branch
      %816 = sbr.rel (0) target = $region37
    $region36: #{tpu_custom_call.1} parent=1 // pred_region
      %s818 = ssub.s32 16, 16
      %819 = vsyncadd [#allocation4], %s818
      %s821 = sshll.u32 [#allocation8], 4
      %s822 = int_to_ptr.vmem [resolvable:$true] %s821
      %824 = dma.vmem_to_hbm [thread:$0]  %s822, 16, %s5, [#allocation4]
    $region37: #{tpu_custom_call.1} parent=1 // pred_fallthru
      _
    // Predicated region
    $region38: #{tpu_custom_call.1} parent=1 // pred_check
      _
    $region39: #{tpu_custom_call.1} parent=1 // pred_check_branch
      %826 = sbr.rel (0) target = $region41
    $region40: #{tpu_custom_call.1} parent=1 // pred_region
      %827 = dma.done [#allocation4], 16
    $region41: #{tpu_custom_call.1} parent=1 // pred_fallthru
      _
    %828 = vsyncpa [#allocation3], 1
    %829 = vsyncpa [#allocation6], 1
    %830 = vsyncpa [#allocation4], 1

</llo_original>
